<compile_context>
chip_gen: v5e
topology: v5e:2x2
jax: 0.10.0
libtpu: 0.0.40
codegen_flags: <defaults>
</compile_context>

<pallas_src>
import jax
import jax.numpy as jnp
from jax import lax
from jax.experimental import pallas as pl
from jax.experimental.pallas import tpu as pltpu

_EPS = 1e-5      # PyTorch BatchNorm1d default eps
_PAD = 8         # max dilation used by the block (d8)
_OFFSETS = (-8, -4, -2, -1, 0, 1, 2, 4, 8)   # distinct tap offsets of d1/d2/d4/d8


def _make_kernel(B, L, nOut, Wt, Wo, add, offsets):
    inv_n = 1.0 / float(B * L)

    def kernel(x_ref, mask_ref, w1_ref, b1_ref, g1_ref, be1_ref,
               w9_ref, g2_ref, be2_ref, a_ref, out_ref):
        x = x_ref[...]                       # (nIn, Wt)  lane-dense, zero-padded
        mask = mask_ref[...]                 # (1,  Wt)   1.0 on valid columns

        # ---- c1: pointwise Conv1d(nIn -> n, k=1) as one MXU matmul ----
        out1 = jnp.dot(w1_ref[...], x, preferred_element_type=jnp.float32)
        out1 = out1 + b1_ref[...]            # (n, Wt)

        # ---- br1: BatchNorm1d (batch statistics over valid cols) + PReLU ----
        a1 = a_ref[0]
        mean1 = jnp.sum(out1 * mask, axis=1, keepdims=True) * inv_n
        cent1 = (out1 - mean1) * mask
        var1 = jnp.sum(cent1 * cent1, axis=1, keepdims=True) * inv_n
        y = g1_ref[...] * ((out1 - mean1) * lax.rsqrt(var1 + _EPS)) + be1_ref[...]
        y = jnp.where(y >= 0.0, y, a1 * y)
        y = y * mask                         # re-zero pads => conv zero padding

        # ---- d1/d2/d4/d8 + add-chain folded into 9 MXU dots over tap offsets ----
        comb = jnp.zeros((nOut, Wo), jnp.float32)
        for idx, s in enumerate(offsets):    # static unroll (9 iterations)
            comb = comb + jnp.dot(w9_ref[idx],
                                  y[:, _PAD + s: _PAD + s + Wo],
                                  preferred_element_type=jnp.float32)
        if add:                              # residual add (nIn == nOut)
            comb = comb + x[:, _PAD: _PAD + Wo]

        # ---- br2: BatchNorm1d + PReLU, single full-tile store ----
        a2 = a_ref[1]
        mo = mask[:, _PAD: _PAD + Wo]
        mean2 = jnp.sum(comb * mo, axis=1, keepdims=True) * inv_n
        cent2 = (comb - mean2) * mo
        var2 = jnp.sum(cent2 * cent2, axis=1, keepdims=True) * inv_n
        o = g2_ref[...] * ((comb - mean2) * lax.rsqrt(var2 + _EPS)) + be2_ref[...]
        out_ref[...] = jnp.where(o >= 0.0, o, a2 * o)

    return kernel


def _build_folded_weights(wd1, wd2, wd4, wd8, n, n1, nOut):
    """Fold d1/d2/d4/d8 weights + the add1/add2/add3 chain into (9, nOut, n)."""
    oix = {s: i for i, s in enumerate(_OFFSETS)}
    W9 = jnp.zeros((len(_OFFSETS), nOut, n), jnp.float32)

    def scatter(W9, w, d, row_starts):
        oc = w.shape[0]
        for r0 in row_starts:
            for k, s in enumerate((-d, 0, d)):   # PyTorch cross-correlation taps
                W9 = W9.at[oix[s], r0:r0 + oc].add(w[:, :, k].astype(jnp.float32))
        return W9

    W9 = scatter(W9, wd1, 1, (0,))                              # d1
    W9 = scatter(W9, wd2, 2, (n1, n1 + n, n1 + 2 * n))          # d2 in add1/2/3
    W9 = scatter(W9, wd4, 4, (n1 + n, n1 + 2 * n))              # d4 in add2/3
    W9 = scatter(W9, wd8, 8, (n1 + 2 * n,))                     # d8 in add3
    return W9


def dilated_parallel_residual_block_b(x, params, add=True):
    B, nIn, L = x.shape
    w1, b1, g1, be1, a1, wd1, wd2, wd4, wd8, g2, be2, a2 = params
    n = w1.shape[0]
    n1 = wd1.shape[0]
    nOut = g2.shape[0]
    if nIn != nOut:
        add = False

    # ---- lane-dense packing: each batch segment is L + 2*PAD wide ----
    Lp = L + 2 * _PAD
    Wv = B * Lp
    Wo = ((Wv + 127) // 128) * 128      # lane-aligned output width (covers valid)
    Wt = Wo + 2 * _PAD                  # input width (extra guard for +/-8 taps)

    x_t = jnp.transpose(x, (1, 0, 2)).astype(jnp.float32)               # (nIn,B,L)
    x2d = jnp.pad(x_t, ((0, 0), (0, 0), (_PAD, _PAD))).reshape(nIn, Wv)
    x2d = jnp.pad(x2d, ((0, 0), (0, Wt - Wv)))                          # (nIn,Wt)

    col = jnp.arange(Wt)
    valid = (col < Wv) & ((col % Lp) >= _PAD) & ((col % Lp) < _PAD + L)
    mask = valid.astype(jnp.float32)[None, :]                           # (1, Wt)

    W9 = _build_folded_weights(wd1, wd2, wd4, wd8, n, n1, nOut)
    alphas = jnp.concatenate([jnp.ravel(a1)[:1], jnp.ravel(a2)[:1]]).astype(jnp.float32)

    kern = _make_kernel(B, L, nOut, Wt, Wo, add, _OFFSETS)

    vmem = pl.BlockSpec(memory_space=pltpu.MemorySpace.VMEM)
    smem = pl.BlockSpec(memory_space=pltpu.MemorySpace.SMEM)

    outW = pl.pallas_call(
        kern,
        out_shape=jax.ShapeDtypeStruct((nOut, Wo), jnp.float32),
        in_specs=[vmem, vmem,                      # x2d, mask
                  vmem, vmem, vmem, vmem,          # w1, b1, g1, be1
                  vmem, vmem, vmem,                # W9, g2, be2
                  smem],                           # PReLU alphas
        out_specs=vmem,
    )(x2d, mask,
      w1.astype(jnp.float32), b1.reshape(n, 1).astype(jnp.float32),
      g1.reshape(n, 1).astype(jnp.float32), be1.reshape(n, 1).astype(jnp.float32),
      W9, g2.reshape(nOut, 1).astype(jnp.float32), be2.reshape(nOut, 1).astype(jnp.float32),
      alphas)

    # extract the valid window of each batch segment -> (B, nOut, L)
    return jnp.stack([outW[:, b * Lp: b * Lp + L] for b in range(B)], axis=0)


# ----------------------- pure-JAX reference (for verification) -----------------------
def _bn_prelu(x, gamma, beta, a):
    m = jnp.mean(x, axis=(0, 2), keepdims=True)
    v = jnp.mean((x - m) ** 2, axis=(0, 2), keepdims=True)
    y = gamma[None, :, None] * (x - m) * lax.rsqrt(v + _EPS) + beta[None, :, None]
    return jnp.where(y >= 0, y, a * y)


def reference_forward(x, params, add=True):
    w1, b1, g1, be1, a1, wd1, wd2, wd4, wd8, g2, be2, a2 = params
    nOut = g2.shape[0]
    if x.shape[1] != nOut:
        add = False
    out1 = jnp.einsum('oi,bil->bol', w1, x) + b1[None, :, None]
    out1 = _bn_prelu(out1, g1, be1, a1)

    def dconv(y, w, d):
        return lax.conv_general_dilated(
            y, w, window_strides=(1,), padding=[(d, d)],
            rhs_dilation=(d,), dimension_numbers=('NCH', 'OIH', 'NCH'))

    d1 = dconv(out1, wd1, 1)
    d2 = dconv(out1, wd2, 2)
    d4 = dconv(out1, wd4, 4)
    d8 = dconv(out1, wd8, 8)
    add1 = d2
    add2 = add1 + d4
    add3 = add2 + d8
    combine = jnp.concatenate([d1, add1, add2, add3], axis=1)
    if add:
        combine = x + combine
    return _bn_prelu(combine, g2, be2, a2)


if __name__ == "__main__":
    key = jax.random.PRNGKey(0)
    B, nIn, nOut, L = 2, 16, 16, 16
    n = nOut // 4
    n1 = nOut - 3 * n

    ks = jax.random.split(key, 11)
    x = jax.random.normal(ks[0], (B, nIn, L), jnp.float32)
    w1 = 0.3 * jax.random.normal(ks[1], (n, nIn), jnp.float32)
    b1 = 0.1 * jax.random.normal(ks[2], (n,), jnp.float32)
    g1 = 1.0 + 0.1 * jax.random.normal(ks[3], (n,), jnp.float32)
    be1 = 0.1 * jax.random.normal(ks[4], (n,), jnp.float32)
    a1 = jnp.array([0.25], jnp.float32)          # PReLU default init
    wd1 = 0.3 * jax.random.normal(ks[5], (n1, n, 3), jnp.float32)
    wd2 = 0.3 * jax.random.normal(ks[6], (n, n, 3), jnp.float32)
    wd4 = 0.3 * jax.random.normal(ks[7], (n, n, 3), jnp.float32)
    wd8 = 0.3 * jax.random.normal(ks[8], (n, n, 3), jnp.float32)
    g2 = 1.0 + 0.1 * jax.random.normal(ks[9], (nOut,), jnp.float32)
    be2 = 0.1 * jax.random.normal(ks[10], (nOut,), jnp.float32)
    a2 = jnp.array([0.25], jnp.float32)

    params = (w1, b1, g1, be1, a1, wd1, wd2, wd4, wd8, g2, be2, a2)

    out = dilated_parallel_residual_block_b(x, params)
    out = jax.block_until_ready(out)

    ref = reference_forward(x, params)
    assert out.shape == (B, nOut, L)
    assert jnp.allclose(out, ref, atol=1e-3, rtol=1e-3), float(jnp.max(jnp.abs(out - ref)))
    print("KERNEL_OK")
</pallas_src>

<mosaic_0001>
module attributes {stable_mosaic.version = 11 : i64} {
  func.func @kernel(%arg0: memref<16x144xf32, #tpu.memory_space<vmem>>, %arg1: memref<1x144xf32, #tpu.memory_space<vmem>>, %arg2: memref<4x16xf32, #tpu.memory_space<vmem>>, %arg3: memref<4x1xf32, #tpu.memory_space<vmem>>, %arg4: memref<4x1xf32, #tpu.memory_space<vmem>>, %arg5: memref<4x1xf32, #tpu.memory_space<vmem>>, %arg6: memref<9x16x4xf32, #tpu.memory_space<vmem>>, %arg7: memref<16x1xf32, #tpu.memory_space<vmem>>, %arg8: memref<16x1xf32, #tpu.memory_space<vmem>>, %arg9: memref<2xf32, #tpu.memory_space<smem>>, %arg10: memref<16x128xf32, #tpu.memory_space<vmem>>) attributes {dimension_semantics = [], scalar_prefetch = 0 : i64, scratch_operands = 0 : i64, tpu.core_type = #tpu.core_type<tc>} {
    %c0 = arith.constant 0 : index
    %c0_0 = arith.constant 0 : index
    %0 = vector.load %arg0[%c0, %c0_0] : memref<16x144xf32, #tpu.memory_space<vmem>>, vector<16x144xf32>
    %c0_1 = arith.constant 0 : index
    %c0_2 = arith.constant 0 : index
    %1 = vector.load %arg1[%c0_1, %c0_2] : memref<1x144xf32, #tpu.memory_space<vmem>>, vector<1x144xf32>
    %c0_3 = arith.constant 0 : index
    %c0_4 = arith.constant 0 : index
    %2 = vector.load %arg2[%c0_3, %c0_4] : memref<4x16xf32, #tpu.memory_space<vmem>>, vector<4x16xf32>
    %cst = arith.constant dense<0.000000e+00> : vector<4x144xf32>
    %3 = tpu.matmul %2, %0, %cst {dimension_numbers = #tpu.dot_dimension_numbers<[1], [0], [0], [1], [0, 0, 1, 1], [], []>} : vector<4x16xf32>, vector<16x144xf32>, vector<4x144xf32> -> vector<4x144xf32>
    %c0_5 = arith.constant 0 : index
    %c0_6 = arith.constant 0 : index
    %4 = vector.load %arg3[%c0_5, %c0_6] : memref<4x1xf32, #tpu.memory_space<vmem>>, vector<4x1xf32>
    %5 = vector.broadcast %4 : vector<4x1xf32> to vector<4x144xf32>
    %6 = arith.addf %3, %5 : vector<4x144xf32>
    %c0_7 = arith.constant 0 : index
    %7 = memref.load %arg9[%c0_7] : memref<2xf32, #tpu.memory_space<smem>>
    %8 = vector.broadcast %1 : vector<1x144xf32> to vector<4x144xf32>
    %9 = arith.mulf %6, %8 : vector<4x144xf32>
    %cst_8 = arith.constant dense<0.000000e+00> : vector<4xf32>
    %10 = vector.multi_reduction <add>, %9, %cst_8 [1] : vector<4x144xf32> to vector<4xf32>
    %11 = vector.shape_cast %10 : vector<4xf32> to vector<4x1xf32>
    %cst_9 = arith.constant 3.125000e-02 : f32
    %12 = vector.broadcast %cst_9 : f32 to vector<4x1xf32>
    %13 = arith.mulf %11, %12 : vector<4x1xf32>
    %14 = vector.broadcast %13 : vector<4x1xf32> to vector<4x144xf32>
    %15 = arith.subf %6, %14 : vector<4x144xf32>
    %16 = vector.broadcast %1 : vector<1x144xf32> to vector<4x144xf32>
    %17 = arith.mulf %15, %16 : vector<4x144xf32>
    %18 = arith.mulf %17, %17 : vector<4x144xf32>
    %cst_10 = arith.constant dense<0.000000e+00> : vector<4xf32>
    %19 = vector.multi_reduction <add>, %18, %cst_10 [1] : vector<4x144xf32> to vector<4xf32>
    %20 = vector.shape_cast %19 : vector<4xf32> to vector<4x1xf32>
    %cst_11 = arith.constant 3.125000e-02 : f32
    %21 = vector.broadcast %cst_11 : f32 to vector<4x1xf32>
    %22 = arith.mulf %20, %21 : vector<4x1xf32>
    %c0_12 = arith.constant 0 : index
    %c0_13 = arith.constant 0 : index
    %23 = vector.load %arg4[%c0_12, %c0_13] : memref<4x1xf32, #tpu.memory_space<vmem>>, vector<4x1xf32>
    %24 = vector.broadcast %13 : vector<4x1xf32> to vector<4x144xf32>
    %25 = arith.subf %6, %24 : vector<4x144xf32>
    %cst_14 = arith.constant 9.99999974E-6 : f32
    %26 = vector.broadcast %cst_14 : f32 to vector<4x1xf32>
    %27 = arith.addf %22, %26 : vector<4x1xf32>
    %28 = math.rsqrt %27 : vector<4x1xf32>
    %29 = vector.broadcast %28 : vector<4x1xf32> to vector<4x144xf32>
    %30 = arith.mulf %25, %29 : vector<4x144xf32>
    %31 = vector.broadcast %23 : vector<4x1xf32> to vector<4x144xf32>
    %32 = arith.mulf %31, %30 : vector<4x144xf32>
    %c0_15 = arith.constant 0 : index
    %c0_16 = arith.constant 0 : index
    %33 = vector.load %arg5[%c0_15, %c0_16] : memref<4x1xf32, #tpu.memory_space<vmem>>, vector<4x1xf32>
    %34 = vector.broadcast %33 : vector<4x1xf32> to vector<4x144xf32>
    %35 = arith.addf %32, %34 : vector<4x144xf32>
    %cst_17 = arith.constant 0.000000e+00 : f32
    %36 = vector.broadcast %cst_17 : f32 to vector<4x144xf32>
    %37 = arith.cmpf oge, %35, %36 : vector<4x144xf32>
    %38 = vector.broadcast %7 : f32 to vector<4x144xf32>
    %39 = arith.mulf %38, %35 : vector<4x144xf32>
    %40 = arith.select %37, %35, %39 : vector<4x144xi1>, vector<4x144xf32>
    %41 = vector.broadcast %1 : vector<1x144xf32> to vector<4x144xf32>
    %42 = arith.mulf %40, %41 : vector<4x144xf32>
    %cst_18 = arith.constant 0.000000e+00 : f32
    %43 = vector.broadcast %cst_18 : f32 to vector<16x128xf32>
    %c0_19 = arith.constant 0 : index
    %c0_20 = arith.constant 0 : index
    %c0_21 = arith.constant 0 : index
    %44 = vector.load %arg6[%c0_19, %c0_20, %c0_21] : memref<9x16x4xf32, #tpu.memory_space<vmem>>, vector<1x16x4xf32>
    %45 = vector.shape_cast %44 : vector<1x16x4xf32> to vector<16x4xf32>
    %46 = vector.extract_strided_slice %42 {offsets = [0, 0], sizes = [4, 128], strides = [1, 1]} : vector<4x144xf32> to vector<4x128xf32>
    %cst_22 = arith.constant dense<0.000000e+00> : vector<16x128xf32>
    %47 = tpu.matmul %45, %46, %cst_22 {dimension_numbers = #tpu.dot_dimension_numbers<[1], [0], [0], [1], [0, 0, 1, 1], [], []>} : vector<16x4xf32>, vector<4x128xf32>, vector<16x128xf32> -> vector<16x128xf32>
    %48 = arith.addf %43, %47 : vector<16x128xf32>
    %c1 = arith.constant 1 : index
    %c0_23 = arith.constant 0 : index
    %c0_24 = arith.constant 0 : index
    %49 = vector.load %arg6[%c1, %c0_23, %c0_24] : memref<9x16x4xf32, #tpu.memory_space<vmem>>, vector<1x16x4xf32>
    %50 = vector.shape_cast %49 : vector<1x16x4xf32> to vector<16x4xf32>
    %51 = vector.extract_strided_slice %42 {offsets = [0, 4], sizes = [4, 128], strides = [1, 1]} : vector<4x144xf32> to vector<4x128xf32>
    %cst_25 = arith.constant dense<0.000000e+00> : vector<16x128xf32>
    %52 = tpu.matmul %50, %51, %cst_25 {dimension_numbers = #tpu.dot_dimension_numbers<[1], [0], [0], [1], [0, 0, 1, 1], [], []>} : vector<16x4xf32>, vector<4x128xf32>, vector<16x128xf32> -> vector<16x128xf32>
    %53 = arith.addf %48, %52 : vector<16x128xf32>
    %c2 = arith.constant 2 : index
    %c0_26 = arith.constant 0 : index
    %c0_27 = arith.constant 0 : index
    %54 = vector.load %arg6[%c2, %c0_26, %c0_27] : memref<9x16x4xf32, #tpu.memory_space<vmem>>, vector<1x16x4xf32>
    %55 = vector.shape_cast %54 : vector<1x16x4xf32> to vector<16x4xf32>
    %56 = vector.extract_strided_slice %42 {offsets = [0, 6], sizes = [4, 128], strides = [1, 1]} : vector<4x144xf32> to vector<4x128xf32>
    %cst_28 = arith.constant dense<0.000000e+00> : vector<16x128xf32>
    %57 = tpu.matmul %55, %56, %cst_28 {dimension_numbers = #tpu.dot_dimension_numbers<[1], [0], [0], [1], [0, 0, 1, 1], [], []>} : vector<16x4xf32>, vector<4x128xf32>, vector<16x128xf32> -> vector<16x128xf32>
    %58 = arith.addf %53, %57 : vector<16x128xf32>
    %c3 = arith.constant 3 : index
    %c0_29 = arith.constant 0 : index
    %c0_30 = arith.constant 0 : index
    %59 = vector.load %arg6[%c3, %c0_29, %c0_30] : memref<9x16x4xf32, #tpu.memory_space<vmem>>, vector<1x16x4xf32>
    %60 = vector.shape_cast %59 : vector<1x16x4xf32> to vector<16x4xf32>
    %61 = vector.extract_strided_slice %42 {offsets = [0, 7], sizes = [4, 128], strides = [1, 1]} : vector<4x144xf32> to vector<4x128xf32>
    %cst_31 = arith.constant dense<0.000000e+00> : vector<16x128xf32>
    %62 = tpu.matmul %60, %61, %cst_31 {dimension_numbers = #tpu.dot_dimension_numbers<[1], [0], [0], [1], [0, 0, 1, 1], [], []>} : vector<16x4xf32>, vector<4x128xf32>, vector<16x128xf32> -> vector<16x128xf32>
    %63 = arith.addf %58, %62 : vector<16x128xf32>
    %c4 = arith.constant 4 : index
    %c0_32 = arith.constant 0 : index
    %c0_33 = arith.constant 0 : index
    %64 = vector.load %arg6[%c4, %c0_32, %c0_33] : memref<9x16x4xf32, #tpu.memory_space<vmem>>, vector<1x16x4xf32>
    %65 = vector.shape_cast %64 : vector<1x16x4xf32> to vector<16x4xf32>
    %66 = vector.extract_strided_slice %42 {offsets = [0, 8], sizes = [4, 128], strides = [1, 1]} : vector<4x144xf32> to vector<4x128xf32>
    %cst_34 = arith.constant dense<0.000000e+00> : vector<16x128xf32>
    %67 = tpu.matmul %65, %66, %cst_34 {dimension_numbers = #tpu.dot_dimension_numbers<[1], [0], [0], [1], [0, 0, 1, 1], [], []>} : vector<16x4xf32>, vector<4x128xf32>, vector<16x128xf32> -> vector<16x128xf32>
    %68 = arith.addf %63, %67 : vector<16x128xf32>
    %c5 = arith.constant 5 : index
    %c0_35 = arith.constant 0 : index
    %c0_36 = arith.constant 0 : index
    %69 = vector.load %arg6[%c5, %c0_35, %c0_36] : memref<9x16x4xf32, #tpu.memory_space<vmem>>, vector<1x16x4xf32>
    %70 = vector.shape_cast %69 : vector<1x16x4xf32> to vector<16x4xf32>
    %71 = vector.extract_strided_slice %42 {offsets = [0, 9], sizes = [4, 128], strides = [1, 1]} : vector<4x144xf32> to vector<4x128xf32>
    %cst_37 = arith.constant dense<0.000000e+00> : vector<16x128xf32>
    %72 = tpu.matmul %70, %71, %cst_37 {dimension_numbers = #tpu.dot_dimension_numbers<[1], [0], [0], [1], [0, 0, 1, 1], [], []>} : vector<16x4xf32>, vector<4x128xf32>, vector<16x128xf32> -> vector<16x128xf32>
    %73 = arith.addf %68, %72 : vector<16x128xf32>
    %c6 = arith.constant 6 : index
    %c0_38 = arith.constant 0 : index
    %c0_39 = arith.constant 0 : index
    %74 = vector.load %arg6[%c6, %c0_38, %c0_39] : memref<9x16x4xf32, #tpu.memory_space<vmem>>, vector<1x16x4xf32>
    %75 = vector.shape_cast %74 : vector<1x16x4xf32> to vector<16x4xf32>
    %76 = vector.extract_strided_slice %42 {offsets = [0, 10], sizes = [4, 128], strides = [1, 1]} : vector<4x144xf32> to vector<4x128xf32>
    %cst_40 = arith.constant dense<0.000000e+00> : vector<16x128xf32>
    %77 = tpu.matmul %75, %76, %cst_40 {dimension_numbers = #tpu.dot_dimension_numbers<[1], [0], [0], [1], [0, 0, 1, 1], [], []>} : vector<16x4xf32>, vector<4x128xf32>, vector<16x128xf32> -> vector<16x128xf32>
    %78 = arith.addf %73, %77 : vector<16x128xf32>
    %c7 = arith.constant 7 : index
    %c0_41 = arith.constant 0 : index
    %c0_42 = arith.constant 0 : index
    %79 = vector.load %arg6[%c7, %c0_41, %c0_42] : memref<9x16x4xf32, #tpu.memory_space<vmem>>, vector<1x16x4xf32>
    %80 = vector.shape_cast %79 : vector<1x16x4xf32> to vector<16x4xf32>
    %81 = vector.extract_strided_slice %42 {offsets = [0, 12], sizes = [4, 128], strides = [1, 1]} : vector<4x144xf32> to vector<4x128xf32>
    %cst_43 = arith.constant dense<0.000000e+00> : vector<16x128xf32>
    %82 = tpu.matmul %80, %81, %cst_43 {dimension_numbers = #tpu.dot_dimension_numbers<[1], [0], [0], [1], [0, 0, 1, 1], [], []>} : vector<16x4xf32>, vector<4x128xf32>, vector<16x128xf32> -> vector<16x128xf32>
    %83 = arith.addf %78, %82 : vector<16x128xf32>
    %c8 = arith.constant 8 : index
    %c0_44 = arith.constant 0 : index
    %c0_45 = arith.constant 0 : index
    %84 = vector.load %arg6[%c8, %c0_44, %c0_45] : memref<9x16x4xf32, #tpu.memory_space<vmem>>, vector<1x16x4xf32>
    %85 = vector.shape_cast %84 : vector<1x16x4xf32> to vector<16x4xf32>
    %86 = vector.extract_strided_slice %42 {offsets = [0, 16], sizes = [4, 128], strides = [1, 1]} : vector<4x144xf32> to vector<4x128xf32>
    %cst_46 = arith.constant dense<0.000000e+00> : vector<16x128xf32>
    %87 = tpu.matmul %85, %86, %cst_46 {dimension_numbers = #tpu.dot_dimension_numbers<[1], [0], [0], [1], [0, 0, 1, 1], [], []>} : vector<16x4xf32>, vector<4x128xf32>, vector<16x128xf32> -> vector<16x128xf32>
    %88 = arith.addf %83, %87 : vector<16x128xf32>
    %89 = vector.extract_strided_slice %0 {offsets = [0, 8], sizes = [16, 128], strides = [1, 1]} : vector<16x144xf32> to vector<16x128xf32>
    %90 = arith.addf %88, %89 : vector<16x128xf32>
    %c1_47 = arith.constant 1 : index
    %91 = memref.load %arg9[%c1_47] : memref<2xf32, #tpu.memory_space<smem>>
    %92 = vector.extract_strided_slice %1 {offsets = [0, 8], sizes = [1, 128], strides = [1, 1]} : vector<1x144xf32> to vector<1x128xf32>
    %93 = vector.broadcast %92 : vector<1x128xf32> to vector<16x128xf32>
    %94 = arith.mulf %90, %93 : vector<16x128xf32>
    %cst_48 = arith.constant dense<0.000000e+00> : vector<16xf32>
    %95 = vector.multi_reduction <add>, %94, %cst_48 [1] : vector<16x128xf32> to vector<16xf32>
    %96 = vector.shape_cast %95 : vector<16xf32> to vector<16x1xf32>
    %cst_49 = arith.constant 3.125000e-02 : f32
    %97 = vector.broadcast %cst_49 : f32 to vector<16x1xf32>
    %98 = arith.mulf %96, %97 : vector<16x1xf32>
    %99 = vector.broadcast %98 : vector<16x1xf32> to vector<16x128xf32>
    %100 = arith.subf %90, %99 : vector<16x128xf32>
    %101 = vector.broadcast %92 : vector<1x128xf32> to vector<16x128xf32>
    %102 = arith.mulf %100, %101 : vector<16x128xf32>
    %103 = arith.mulf %102, %102 : vector<16x128xf32>
    %cst_50 = arith.constant dense<0.000000e+00> : vector<16xf32>
    %104 = vector.multi_reduction <add>, %103, %cst_50 [1] : vector<16x128xf32> to vector<16xf32>
    %105 = vector.shape_cast %104 : vector<16xf32> to vector<16x1xf32>
    %cst_51 = arith.constant 3.125000e-02 : f32
    %106 = vector.broadcast %cst_51 : f32 to vector<16x1xf32>
    %107 = arith.mulf %105, %106 : vector<16x1xf32>
    %c0_52 = arith.constant 0 : index
    %c0_53 = arith.constant 0 : index
    %108 = vector.load %arg7[%c0_52, %c0_53] : memref<16x1xf32, #tpu.memory_space<vmem>>, vector<16x1xf32>
    %109 = vector.broadcast %98 : vector<16x1xf32> to vector<16x128xf32>
    %110 = arith.subf %90, %109 : vector<16x128xf32>
    %cst_54 = arith.constant 9.99999974E-6 : f32
    %111 = vector.broadcast %cst_54 : f32 to vector<16x1xf32>
    %112 = arith.addf %107, %111 : vector<16x1xf32>
    %113 = math.rsqrt %112 : vector<16x1xf32>
    %114 = vector.broadcast %113 : vector<16x1xf32> to vector<16x128xf32>
    %115 = arith.mulf %110, %114 : vector<16x128xf32>
    %116 = vector.broadcast %108 : vector<16x1xf32> to vector<16x128xf32>
    %117 = arith.mulf %116, %115 : vector<16x128xf32>
    %c0_55 = arith.constant 0 : index
    %c0_56 = arith.constant 0 : index
    %118 = vector.load %arg8[%c0_55, %c0_56] : memref<16x1xf32, #tpu.memory_space<vmem>>, vector<16x1xf32>
    %119 = vector.broadcast %118 : vector<16x1xf32> to vector<16x128xf32>
    %120 = arith.addf %117, %119 : vector<16x128xf32>
    %cst_57 = arith.constant 0.000000e+00 : f32
    %121 = vector.broadcast %cst_57 : f32 to vector<16x128xf32>
    %122 = arith.cmpf oge, %120, %121 : vector<16x128xf32>
    %123 = vector.broadcast %91 : f32 to vector<16x128xf32>
    %124 = arith.mulf %123, %120 : vector<16x128xf32>
    %125 = arith.select %122, %120, %124 : vector<16x128xi1>, vector<16x128xf32>
    %c0_58 = arith.constant 0 : index
    %c0_59 = arith.constant 0 : index
    %126 = vector.load %arg10[%c0_58, %c0_59] : memref<16x128xf32, #tpu.memory_space<vmem>>, vector<16x128xf32>
    tpu.vector_store %arg10[%c0_58, %c0_59], %125 {strides = array<i32>} : memref<16x128xf32, #tpu.memory_space<vmem>>, vector<16x128xf32>,
    return
  }
}

</mosaic_0001>

<llo_original>
// kernel: tpu_custom_call.1
$region0: #{tpu_custom_call.1}
  #allocation0 [shape = 'u32[]', space=smem, size = 0x4, offset = 0x4, fixed_abs, tag = 'smem constant byte address 0x4 - core index']
  #allocation1 [shape = 'u32[72,128]{1,0:T(1,128)}', space=vmem, size = 0x9000, scoped, tag = 'internal scratch']
  %s0 = inlined_call_operand.vmem [shape: f32[16,144], index: 0, kind: input, shape index: {}]
  %s1 = inlined_call_operand.vmem [shape: f32[1,144], index: 1, kind: input, shape index: {}]
  %s2 = inlined_call_operand.vmem [shape: f32[4,16], index: 2, kind: input, shape index: {}]
  %s3 = inlined_call_operand.vmem [shape: f32[4,1], index: 3, kind: input, shape index: {}]
  %s4 = inlined_call_operand.vmem [shape: f32[4,1], index: 4, kind: input, shape index: {}]
  %s5 = inlined_call_operand.vmem [shape: f32[4,1], index: 5, kind: input, shape index: {}]
  %s6 = inlined_call_operand.vmem [shape: f32[9,16,4], index: 6, kind: input, shape index: {}]
  %s7 = inlined_call_operand.vmem [shape: f32[16,1], index: 7, kind: input, shape index: {}]
  %s8 = inlined_call_operand.vmem [shape: f32[16,1], index: 8, kind: input, shape index: {}]
  %s9 = inlined_call_operand.vmem [shape: f32[2], index: 9, kind: input, shape index: {}]
  %s10 = inlined_call_operand.hbm [shape: f32[16,128], index: 10, kind: output, shape index: {}]
  %s11 = sld [smem:[#allocation0]]
  $region54: #{tpu_custom_call.1} parent=0
    _
  %s13 = ssub.s32 1, %s11
  %s14 = scalar_select 0, %s13, %s11
  $region1: #{tpu_custom_call.1} parent=0
    #allocation2 [shape = 'u8[512]{0}', space=smem, size = 0x200, scoped, tag = 'input window, operand 9, single buffered']
    #allocation3 [shape = 's32[1]{0}', space=sflag, size = 0x4, scoped, tag = 'scoped memory for tpu_custom_call.1']
    #allocation4 [shape = 's32[1]{0}', space=sflag, size = 0x4, scoped, tag = 'scoped memory for tpu_custom_call.1']
    #allocation5 [shape = 'u8[8192]{0}', space=vmem, size = 0x2000, scoped, tag = 'output window, operand 0, single buffered']
    %15 = vsyncpa [#allocation4], 0
    %16 = vsyncpa [#allocation3], 0
    // Predicated region
    $region2: #{tpu_custom_call.1} parent=1 // pred_check
      _
    $region3: #{tpu_custom_call.1} parent=1 // pred_check_branch
      %18 = sbr.rel (0) target = $region5
    $region4: #{tpu_custom_call.1} parent=1 // pred_region
      _
    $region5: #{tpu_custom_call.1} parent=1 // pred_fallthru
      _
    // Predicated region
    $region6: #{tpu_custom_call.1} parent=1 // pred_check
      _
    $region7: #{tpu_custom_call.1} parent=1 // pred_check_branch
      %20 = sbr.rel (0) target = $region9
    $region8: #{tpu_custom_call.1} parent=1 // pred_region
      _
    $region9: #{tpu_custom_call.1} parent=1 // pred_fallthru
      _
    // Predicated region
    $region10: #{tpu_custom_call.1} parent=1 // pred_check
      _
    $region11: #{tpu_custom_call.1} parent=1 // pred_check_branch
      %22 = sbr.rel (0) target = $region13
    $region12: #{tpu_custom_call.1} parent=1 // pred_region
      _
    $region13: #{tpu_custom_call.1} parent=1 // pred_fallthru
      _
    // Predicated region
    $region14: #{tpu_custom_call.1} parent=1 // pred_check
      _
    $region15: #{tpu_custom_call.1} parent=1 // pred_check_branch
      %24 = sbr.rel (0) target = $region17
    $region16: #{tpu_custom_call.1} parent=1 // pred_region
      _
    $region17: #{tpu_custom_call.1} parent=1 // pred_fallthru
      _
    // Predicated region
    $region18: #{tpu_custom_call.1} parent=1 // pred_check
      _
    $region19: #{tpu_custom_call.1} parent=1 // pred_check_branch
      %26 = sbr.rel (0) target = $region21
    $region20: #{tpu_custom_call.1} parent=1 // pred_region
      _
    $region21: #{tpu_custom_call.1} parent=1 // pred_fallthru
      _
    // Predicated region
    $region22: #{tpu_custom_call.1} parent=1 // pred_check
      _
    $region23: #{tpu_custom_call.1} parent=1 // pred_check_branch
      %28 = sbr.rel (0) target = $region25
    $region24: #{tpu_custom_call.1} parent=1 // pred_region
      _
    $region25: #{tpu_custom_call.1} parent=1 // pred_fallthru
      _
    // Predicated region
    $region26: #{tpu_custom_call.1} parent=1 // pred_check
      _
    $region27: #{tpu_custom_call.1} parent=1 // pred_check_branch
      %30 = sbr.rel (0) target = $region29
    $region28: #{tpu_custom_call.1} parent=1 // pred_region
      _
    $region29: #{tpu_custom_call.1} parent=1 // pred_fallthru
      _
    // Predicated region
    $region30: #{tpu_custom_call.1} parent=1 // pred_check
      _
    $region31: #{tpu_custom_call.1} parent=1 // pred_check_branch
      %32 = sbr.rel (0) target = $region33
    $region32: #{tpu_custom_call.1} parent=1 // pred_region
      _
    $region33: #{tpu_custom_call.1} parent=1 // pred_fallthru
      _
    // Predicated region
    $region34: #{tpu_custom_call.1} parent=1 // pred_check
      _
    $region35: #{tpu_custom_call.1} parent=1 // pred_check_branch
      %34 = sbr.rel (0) target = $region37
    $region36: #{tpu_custom_call.1} parent=1 // pred_region
      _
    $region37: #{tpu_custom_call.1} parent=1 // pred_fallthru
      _
    // Predicated region
    $region38: #{tpu_custom_call.1} parent=1 // pred_check
      _
    $region39: #{tpu_custom_call.1} parent=1 // pred_check_branch
      %36 = sbr.rel (0) target = $region41
    $region40: #{tpu_custom_call.1} parent=1 // pred_region
      %38 = vsyncadd [#allocation4], 0
      %s40 = sshll.u32 %s9, 4
      %s41 = int_to_ptr.vmem [resolvable:$true] %s40
      %43 = dma.vmem_to_smem %s41, 16, [#allocation2], [#allocation4]
    $region41: #{tpu_custom_call.1} parent=1 // pred_fallthru
      _
    // Predicated region
    $region42: #{tpu_custom_call.1} parent=1 // pred_check
      _
    $region43: #{tpu_custom_call.1} parent=1 // pred_check_branch
      %45 = sbr.rel (0) target = $region45
    $region44: #{tpu_custom_call.1} parent=1 // pred_region
      %47 = dma.done [#allocation4], 16
    $region45: #{tpu_custom_call.1} parent=1 // pred_fallthru
      _
    %48 = sfence
    %v49 = vld [vmem:[%s0] sm:$0xff]
    %v50 = vld [vmem:[%s0 + $0x8] sm:$0xff]
    %v51 = vld [vmem:[%s0 + $0x10] sm:$0xff]
    %v52 = vld [vmem:[%s0 + $0x18] sm:$0xff]
    %v53 = vld [vmem:[%s1] sm:$0x3]
    %v54 = vld [vmem:[%s2] sm:$0xf]
    %v55 = vld [vmem:[%s3] sm:$0xf]
    %57 = vset.pattern.permute.xlu0 0
    %58 = vperm.xlu0 %57, %v55
    %v59 = vpop.permute.xlu0 %58
    %vm61 = vcmask 130048
    %v63 = vsel %vm61, %v54, 0
    %65 = vmatpush.msra.mxu0 0.0
    %66 = vmatpush.msra.mxu0 0.0
    %67 = vmatpush.msra.mxu0 0.0
    %68 = vmatpush.msra.mxu0 0.0
    %69 = vmatpush.msra.mxu0 0.0
    %70 = vmatpush.msra.mxu0 0.0
    %71 = vmatpush.msra.mxu0 0.0
    %72 = vmatpush.msra.mxu0 0.0
    %73 = vmatpush.msra.mxu0 0.0
    %74 = vmatpush.msra.mxu0 0.0
    %75 = vmatpush.msra.mxu0 0.0
    %76 = vmatpush.msra.mxu0 0.0
    %77 = vmatpush.msra.mxu0 0.0
    %78 = vmatpush.msra.mxu0 0.0
    %79 = vmatpush.msra.mxu0 %v51
    %80 = vmatpush.msra.mxu0 %v49
    %81 = vmatmul.f32.gmra.mxu0 %v63
    %v82 = vpop.f32.mrf.mxu0
    %v83 = vadd.f32 %v59, %v82
    %84 = vdwg.mxu0
    %85 = vmatpush.msra.mxu0 0.0
    %86 = vmatpush.msra.mxu0 0.0
    %87 = vmatpush.msra.mxu0 0.0
    %88 = vmatpush.msra.mxu0 0.0
    %89 = vmatpush.msra.mxu0 0.0
    %90 = vmatpush.msra.mxu0 0.0
    %91 = vmatpush.msra.mxu0 0.0
    %92 = vmatpush.msra.mxu0 0.0
    %93 = vmatpush.msra.mxu0 0.0
    %94 = vmatpush.msra.mxu0 0.0
    %95 = vmatpush.msra.mxu0 0.0
    %96 = vmatpush.msra.mxu0 0.0
    %97 = vmatpush.msra.mxu0 0.0
    %98 = vmatpush.msra.mxu0 0.0
    %99 = vmatpush.msra.mxu0 %v52
    %100 = vmatpush.msra.mxu0 %v50
    %101 = vmatmul.f32.gmra.mxu0 %v63
    %v102 = vpop.f32.mrf.mxu0
    %v103 = vadd.f32 %v59, %v102
    %104 = vdwg.mxu0
    %s105 = sld [smem:[#allocation2]]
    %v107 = vperm.slane %v53, 0
    %v108 = vperm.slane %v53, 1
    %v111 = vmul.f32 %v83, %v107
    %v112 = vmul.f32 %v103, %v108
    %vm113 = vcmask 1043456
    %v114 = vsel %vm113, %v111, 0.0
    %vm115 = vcmask 125952
    %v116 = vsel %vm115, %v112, 0.0
    %v117 = vadd.f32 %v114, %v116
    %118 = vadd.xlane.f32.xlu0 %v117
    %v119 = vpop.xlane.xlu0 %118
    %v120 = vmul.f32 %v119, 0.03125
    %v121 = vsub.f32 %v83, %v120
    %v122 = vsub.f32 %v103, %v120
    %v123 = vmul.f32 %v121, %v107
    %v124 = vmul.f32 %v122, %v108
    %v125 = vmul.f32 %v123, %v123
    %v126 = vmul.f32 %v124, %v124
    %v127 = vsel %vm113, %v125, 0.0
    %v128 = vsel %vm115, %v126, 0.0
    %v129 = vadd.f32 %v127, %v128
    %130 = vadd.xlane.f32.xlu0 %v129
    %v131 = vpop.xlane.xlu0 %130
    %v132 = vmul.f32 %v131, 0.03125
    %v133 = vld [vmem:[%s4] sm:$0xf]
    %v134 = vadd.f32 %v132, 1e-05
    %v135 = vrsqrt.pop %v134
    %v136 = vmul.f32 %v135, %v134
    %v137 = vmul.f32 %v136, %v135
    %v138 = vmul.f32 0.5, %v137
    %v139 = vsub.f32 1.5, %v138
    %v140 = vmul.f32 %v135, %v139
    %vm141 = vweird.f32 %v134
    %vm142 = vweird.f32 %v135
    %vm143 = vmor %vm141, %vm142
    %v144 = vsel %vm143, %v135, %v140
    %v145 = vmul.f32 %v121, %v144
    %v146 = vmul.f32 %v122, %v144
    %148 = vset.pattern.permute.xlu0 0
    %149 = vperm.xlu0 %148, %v133
    %v150 = vpop.permute.xlu0 %149
    %v152 = vmul.f32 %v150, %v145
    %v153 = vmul.f32 %v150, %v146
    %v154 = vld [vmem:[%s5] sm:$0xf]
    %156 = vset.pattern.permute.xlu0 0
    %157 = vperm.xlu0 %156, %v154
    %v158 = vpop.permute.xlu0 %157
    %v160 = vadd.f32 %v152, %v158
    %v161 = vadd.f32 %v153, %v158
    %vm162 = vcmp.ge.f32.partialorder %v160, 0.0
    %vm163 = vcmp.ge.f32.partialorder %v161, 0.0
    %v164 = vstv %s105
    %v165 = vmul.f32 %v164, %v160
    %v166 = vmul.f32 %v164, %v161
    %v167 = vsel %vm162, %v160, %v165
    %v168 = vsel %vm163, %v161, %v166
    %v169 = vmul.f32 %v167, %v107
    %v170 = vmul.f32 %v168, %v108
    %v171 = vld [vmem:[%s6] sm:$0xff]
    %v172 = vld [vmem:[%s6 + $0x8] sm:$0xff]
    %s173 = scalar_lea.vmem %s6, 16
    %v174 = vld [vmem:[%s173] sm:$0xff]
    %v175 = vld [vmem:[%s173 + $0x8] sm:$0xff]
    %178 = vrot.lane.b32.xlu0 %v169, 124
    %v179 = vpop.permute.xlu0 %178
    %180 = vrot.lane.b32.xlu0 %v170, 124
    %v181 = vpop.permute.xlu0 %180
    %vm182 = vcmask 1014784
    %v183 = vsel %vm182, %v179, %v181
    %vm184 = vcmask 31744
    %v186 = vsel %vm184, %v174, 0
    %v189 = vsel %vm184, %v175, 0
    %v191 = vsel %vm113, %v183, 0
    %193 = vmatpush.msra.mxu0 0.0
    %194 = vmatpush.msra.mxu0 0.0
    %195 = vmatpush.msra.mxu0 0.0
    %196 = vmatpush.msra.mxu0 0.0
    %197 = vmatpush.msra.mxu0 0.0
    %198 = vmatpush.msra.mxu0 0.0
    %199 = vmatpush.msra.mxu0 0.0
    %200 = vmatpush.msra.mxu0 0.0
    %201 = vmatpush.msra.mxu0 0.0
    %202 = vmatpush.msra.mxu0 0.0
    %203 = vmatpush.msra.mxu0 0.0
    %204 = vmatpush.msra.mxu0 0.0
    %205 = vmatpush.msra.mxu0 0.0
    %206 = vmatpush.msra.mxu0 0.0
    %207 = vmatpush.msra.mxu0 0.0
    %208 = vmatpush.msra.mxu0 %v191
    %209 = vmatmul.f32.gmra.mxu0 %v186
    %v210 = vpop.f32.mrf.mxu0
    %v211 = vadd.f32 0.0, %v210
    %212 = vmatmul.f32.gmra.mxu0 %v189
    %v213 = vpop.f32.mrf.mxu0
    %v214 = vadd.f32 0.0, %v213
    %215 = vdwg.mxu0
    %v217 = vsel %vm184, %v171, 0
    %v220 = vsel %vm184, %v172, 0
    %v222 = vsel %vm113, %v169, 0
    %224 = vmatpush.msra.mxu0 0.0
    %225 = vmatpush.msra.mxu0 0.0
    %226 = vmatpush.msra.mxu0 0.0
    %227 = vmatpush.msra.mxu0 0.0
    %228 = vmatpush.msra.mxu0 0.0
    %229 = vmatpush.msra.mxu0 0.0
    %230 = vmatpush.msra.mxu0 0.0
    %231 = vmatpush.msra.mxu0 0.0
    %232 = vmatpush.msra.mxu0 0.0
    %233 = vmatpush.msra.mxu0 0.0
    %234 = vmatpush.msra.mxu0 0.0
    %235 = vmatpush.msra.mxu0 0.0
    %236 = vmatpush.msra.mxu0 0.0
    %237 = vmatpush.msra.mxu0 0.0
    %238 = vmatpush.msra.mxu0 0.0
    %239 = vmatpush.msra.mxu0 %v222
    %240 = vmatmul.f32.gmra.mxu0 %v217
    %v241 = vpop.f32.mrf.mxu0
    %v242 = vadd.f32 %v211, %v241
    %243 = vmatmul.f32.gmra.mxu0 %v220
    %v244 = vpop.f32.mrf.mxu0
    %v245 = vadd.f32 %v214, %v244
    %246 = vdwg.mxu0
    %s247 = scalar_lea.vmem %s6, 32
    %v248 = vld [vmem:[%s247] sm:$0xff]
    %v249 = vld [vmem:[%s247 + $0x8] sm:$0xff]
    %250 = vrot.lane.b32.xlu0 %v169, 122
    %v251 = vpop.permute.xlu0 %250
    %252 = vrot.lane.b32.xlu0 %v170, 122
    %v253 = vpop.permute.xlu0 %252
    %vm254 = vcmask 998400
    %v255 = vsel %vm254, %v251, %v253
    %v257 = vsel %vm184, %v248, 0
    %v260 = vsel %vm184, %v249, 0
    %v262 = vsel %vm113, %v255, 0
    %264 = vmatpush.msra.mxu0 0.0
    %265 = vmatpush.msra.mxu0 0.0
    %266 = vmatpush.msra.mxu0 0.0
    %267 = vmatpush.msra.mxu0 0.0
    %268 = vmatpush.msra.mxu0 0.0
    %269 = vmatpush.msra.mxu0 0.0
    %270 = vmatpush.msra.mxu0 0.0
    %271 = vmatpush.msra.mxu0 0.0
    %272 = vmatpush.msra.mxu0 0.0
    %273 = vmatpush.msra.mxu0 0.0
    %274 = vmatpush.msra.mxu0 0.0
    %275 = vmatpush.msra.mxu0 0.0
    %276 = vmatpush.msra.mxu0 0.0
    %277 = vmatpush.msra.mxu0 0.0
    %278 = vmatpush.msra.mxu0 0.0
    %279 = vmatpush.msra.mxu0 %v262
    %280 = vmatmul.f32.gmra.mxu0 %v257
    %v281 = vpop.f32.mrf.mxu0
    %v282 = vadd.f32 0.0, %v281
    %283 = vmatmul.f32.gmra.mxu0 %v260
    %v284 = vpop.f32.mrf.mxu0
    %v285 = vadd.f32 0.0, %v284
    %286 = vdwg.mxu0
    %v287 = vadd.f32 %v242, %v282
    %v288 = vadd.f32 %v245, %v285
    %s289 = scalar_lea.vmem %s6, 48
    %v290 = vld [vmem:[%s289] sm:$0xff]
    %v291 = vld [vmem:[%s289 + $0x8] sm:$0xff]
    %292 = vrot.lane.b32.xlu0 %v169, 121
    %v293 = vpop.permute.xlu0 %292
    %294 = vrot.lane.b32.xlu0 %v170, 121
    %v295 = vpop.permute.xlu0 %294
    %vm296 = vcmask 990208
    %v297 = vsel %vm296, %v293, %v295
    %v299 = vsel %vm184, %v290, 0
    %v302 = vsel %vm184, %v291, 0
    %v304 = vsel %vm113, %v297, 0
    %306 = vmatpush.msra.mxu0 0.0
    %307 = vmatpush.msra.mxu0 0.0
    %308 = vmatpush.msra.mxu0 0.0
    %309 = vmatpush.msra.mxu0 0.0
    %310 = vmatpush.msra.mxu0 0.0
    %311 = vmatpush.msra.mxu0 0.0
    %312 = vmatpush.msra.mxu0 0.0
    %313 = vmatpush.msra.mxu0 0.0
    %314 = vmatpush.msra.mxu0 0.0
    %315 = vmatpush.msra.mxu0 0.0
    %316 = vmatpush.msra.mxu0 0.0
    %317 = vmatpush.msra.mxu0 0.0
    %318 = vmatpush.msra.mxu0 0.0
    %319 = vmatpush.msra.mxu0 0.0
    %320 = vmatpush.msra.mxu0 0.0
    %321 = vmatpush.msra.mxu0 %v304
    %322 = vmatmul.f32.gmra.mxu0 %v299
    %v323 = vpop.f32.mrf.mxu0
    %v324 = vadd.f32 0.0, %v323
    %325 = vmatmul.f32.gmra.mxu0 %v302
    %v326 = vpop.f32.mrf.mxu0
    %v327 = vadd.f32 0.0, %v326
    %328 = vdwg.mxu0
    %v329 = vadd.f32 %v287, %v324
    %v330 = vadd.f32 %v288, %v327
    %s331 = scalar_lea.vmem %s6, 64
    %v332 = vld [vmem:[%s331] sm:$0xff]
    %v333 = vld [vmem:[%s331 + $0x8] sm:$0xff]
    %334 = vrot.lane.b32.xlu0 %v169, 120
    %v335 = vpop.permute.xlu0 %334
    %336 = vrot.lane.b32.xlu0 %v170, 120
    %v337 = vpop.permute.xlu0 %336
    %vm338 = vcmask 982016
    %v339 = vsel %vm338, %v335, %v337
    %v341 = vsel %vm184, %v332, 0
    %v344 = vsel %vm184, %v333, 0
    %v346 = vsel %vm113, %v339, 0
    %348 = vmatpush.msra.mxu0 0.0
    %349 = vmatpush.msra.mxu0 0.0
    %350 = vmatpush.msra.mxu0 0.0
    %351 = vmatpush.msra.mxu0 0.0
    %352 = vmatpush.msra.mxu0 0.0
    %353 = vmatpush.msra.mxu0 0.0
    %354 = vmatpush.msra.mxu0 0.0
    %355 = vmatpush.msra.mxu0 0.0
    %356 = vmatpush.msra.mxu0 0.0
    %357 = vmatpush.msra.mxu0 0.0
    %358 = vmatpush.msra.mxu0 0.0
    %359 = vmatpush.msra.mxu0 0.0
    %360 = vmatpush.msra.mxu0 0.0
    %361 = vmatpush.msra.mxu0 0.0
    %362 = vmatpush.msra.mxu0 0.0
    %363 = vmatpush.msra.mxu0 %v346
    %364 = vmatmul.f32.gmra.mxu0 %v341
    %v365 = vpop.f32.mrf.mxu0
    %v366 = vadd.f32 0.0, %v365
    %367 = vmatmul.f32.gmra.mxu0 %v344
    %v368 = vpop.f32.mrf.mxu0
    %v369 = vadd.f32 0.0, %v368
    %370 = vdwg.mxu0
    %v371 = vadd.f32 %v329, %v366
    %v372 = vadd.f32 %v330, %v369
    %s373 = scalar_lea.vmem %s6, 80
    %v374 = vld [vmem:[%s373] sm:$0xff]
    %v375 = vld [vmem:[%s373 + $0x8] sm:$0xff]
    %376 = vrot.lane.b32.xlu0 %v169, 119
    %v377 = vpop.permute.xlu0 %376
    %378 = vrot.lane.b32.xlu0 %v170, 119
    %v379 = vpop.permute.xlu0 %378
    %vm380 = vcmask 973824
    %v381 = vsel %vm380, %v377, %v379
    %v383 = vsel %vm184, %v374, 0
    %v386 = vsel %vm184, %v375, 0
    %v388 = vsel %vm113, %v381, 0
    %390 = vmatpush.msra.mxu0 0.0
    %391 = vmatpush.msra.mxu0 0.0
    %392 = vmatpush.msra.mxu0 0.0
    %393 = vmatpush.msra.mxu0 0.0
    %394 = vmatpush.msra.mxu0 0.0
    %395 = vmatpush.msra.mxu0 0.0
    %396 = vmatpush.msra.mxu0 0.0
    %397 = vmatpush.msra.mxu0 0.0
    %398 = vmatpush.msra.mxu0 0.0
    %399 = vmatpush.msra.mxu0 0.0
    %400 = vmatpush.msra.mxu0 0.0
    %401 = vmatpush.msra.mxu0 0.0
    %402 = vmatpush.msra.mxu0 0.0
    %403 = vmatpush.msra.mxu0 0.0
    %404 = vmatpush.msra.mxu0 0.0
    %405 = vmatpush.msra.mxu0 %v388
    %406 = vmatmul.f32.gmra.mxu0 %v383
    %v407 = vpop.f32.mrf.mxu0
    %v408 = vadd.f32 0.0, %v407
    %409 = vmatmul.f32.gmra.mxu0 %v386
    %v410 = vpop.f32.mrf.mxu0
    %v411 = vadd.f32 0.0, %v410
    %412 = vdwg.mxu0
    %v413 = vadd.f32 %v371, %v408
    %v414 = vadd.f32 %v372, %v411
    %s415 = scalar_lea.vmem %s6, 96
    %v416 = vld [vmem:[%s415] sm:$0xff]
    %v417 = vld [vmem:[%s415 + $0x8] sm:$0xff]
    %418 = vrot.lane.b32.xlu0 %v169, 118
    %v419 = vpop.permute.xlu0 %418
    %420 = vrot.lane.b32.xlu0 %v170, 118
    %v421 = vpop.permute.xlu0 %420
    %vm422 = vcmask 965632
    %v423 = vsel %vm422, %v419, %v421
    %v425 = vsel %vm184, %v416, 0
    %v428 = vsel %vm184, %v417, 0
    %v430 = vsel %vm113, %v423, 0
    %432 = vmatpush.msra.mxu0 0.0
    %433 = vmatpush.msra.mxu0 0.0
    %434 = vmatpush.msra.mxu0 0.0
    %435 = vmatpush.msra.mxu0 0.0
    %436 = vmatpush.msra.mxu0 0.0
    %437 = vmatpush.msra.mxu0 0.0
    %438 = vmatpush.msra.mxu0 0.0
    %439 = vmatpush.msra.mxu0 0.0
    %440 = vmatpush.msra.mxu0 0.0
    %441 = vmatpush.msra.mxu0 0.0
    %442 = vmatpush.msra.mxu0 0.0
    %443 = vmatpush.msra.mxu0 0.0
    %444 = vmatpush.msra.mxu0 0.0
    %445 = vmatpush.msra.mxu0 0.0
    %446 = vmatpush.msra.mxu0 0.0
    %447 = vmatpush.msra.mxu0 %v430
    %448 = vmatmul.f32.gmra.mxu0 %v425
    %v449 = vpop.f32.mrf.mxu0
    %v450 = vadd.f32 0.0, %v449
    %451 = vmatmul.f32.gmra.mxu0 %v428
    %v452 = vpop.f32.mrf.mxu0
    %v453 = vadd.f32 0.0, %v452
    %454 = vdwg.mxu0
    %v455 = vadd.f32 %v413, %v450
    %v456 = vadd.f32 %v414, %v453
    %s457 = scalar_lea.vmem %s6, 112
    %v458 = vld [vmem:[%s457] sm:$0xff]
    %v459 = vld [vmem:[%s457 + $0x8] sm:$0xff]
    %460 = vrot.lane.b32.xlu0 %v169, 116
    %v461 = vpop.permute.xlu0 %460
    %462 = vrot.lane.b32.xlu0 %v170, 116
    %v463 = vpop.permute.xlu0 %462
    %vm464 = vcmask 949248
    %v465 = vsel %vm464, %v461, %v463
    %v467 = vsel %vm184, %v458, 0
    %v470 = vsel %vm184, %v459, 0
    %v472 = vsel %vm113, %v465, 0
    %474 = vmatpush.msra.mxu0 0.0
    %475 = vmatpush.msra.mxu0 0.0
    %476 = vmatpush.msra.mxu0 0.0
    %477 = vmatpush.msra.mxu0 0.0
    %478 = vmatpush.msra.mxu0 0.0
    %479 = vmatpush.msra.mxu0 0.0
    %480 = vmatpush.msra.mxu0 0.0
    %481 = vmatpush.msra.mxu0 0.0
    %482 = vmatpush.msra.mxu0 0.0
    %483 = vmatpush.msra.mxu0 0.0
    %484 = vmatpush.msra.mxu0 0.0
    %485 = vmatpush.msra.mxu0 0.0
    %486 = vmatpush.msra.mxu0 0.0
    %487 = vmatpush.msra.mxu0 0.0
    %488 = vmatpush.msra.mxu0 0.0
    %489 = vmatpush.msra.mxu0 %v472
    %490 = vmatmul.f32.gmra.mxu0 %v467
    %v491 = vpop.f32.mrf.mxu0
    %v492 = vadd.f32 0.0, %v491
    %493 = vmatmul.f32.gmra.mxu0 %v470
    %v494 = vpop.f32.mrf.mxu0
    %v495 = vadd.f32 0.0, %v494
    %496 = vdwg.mxu0
    %v497 = vadd.f32 %v455, %v492
    %v498 = vadd.f32 %v456, %v495
    %s499 = scalar_lea.vmem %s6, 128
    %v500 = vld [vmem:[%s499] sm:$0xff]
    %v501 = vld [vmem:[%s499 + $0x8] sm:$0xff]
    %502 = vrot.lane.b32.xlu0 %v169, 112
    %v503 = vpop.permute.xlu0 %502
    %504 = vrot.lane.b32.xlu0 %v170, 112
    %v505 = vpop.permute.xlu0 %504
    %vm506 = vcmask 916480
    %v507 = vsel %vm506, %v503, %v505
    %v509 = vsel %vm184, %v500, 0
    %v512 = vsel %vm184, %v501, 0
    %v514 = vsel %vm113, %v507, 0
    %516 = vmatpush.msra.mxu0 0.0
    %517 = vmatpush.msra.mxu0 0.0
    %518 = vmatpush.msra.mxu0 0.0
    %519 = vmatpush.msra.mxu0 0.0
    %520 = vmatpush.msra.mxu0 0.0
    %521 = vmatpush.msra.mxu0 0.0
    %522 = vmatpush.msra.mxu0 0.0
    %523 = vmatpush.msra.mxu0 0.0
    %524 = vmatpush.msra.mxu0 0.0
    %525 = vmatpush.msra.mxu0 0.0
    %526 = vmatpush.msra.mxu0 0.0
    %527 = vmatpush.msra.mxu0 0.0
    %528 = vmatpush.msra.mxu0 0.0
    %529 = vmatpush.msra.mxu0 0.0
    %530 = vmatpush.msra.mxu0 0.0
    %531 = vmatpush.msra.mxu0 %v514
    %532 = vmatmul.f32.gmra.mxu0 %v509
    %v533 = vpop.f32.mrf.mxu0
    %v534 = vadd.f32 0.0, %v533
    %535 = vmatmul.f32.gmra.mxu0 %v512
    %v536 = vpop.f32.mrf.mxu0
    %v537 = vadd.f32 0.0, %v536
    %538 = vdwg.mxu0
    %v539 = vadd.f32 %v497, %v534
    %v540 = vadd.f32 %v498, %v537
    %545 = vrot.lane.b32.xlu0 %v49, 120
    %v546 = vpop.permute.xlu0 %545
    %547 = vrot.lane.b32.xlu0 %v50, 120
    %v548 = vpop.permute.xlu0 %547
    %549 = vrot.lane.b32.xlu0 %v51, 120
    %v550 = vpop.permute.xlu0 %549
    %551 = vrot.lane.b32.xlu0 %v52, 120
    %v552 = vpop.permute.xlu0 %551
    %v553 = vsel %vm338, %v546, %v548
    %v554 = vsel %vm338, %v550, %v552
    %v557 = vadd.f32 %v539, %v553
    %v558 = vadd.f32 %v540, %v554
    %s559 = sld [smem:[#allocation2 + $0x1]]
    %560 = vrot.lane.b32.xlu0 %v107, 120
    %v561 = vpop.permute.xlu0 %560
    %562 = vrot.lane.b32.xlu0 %v108, 120
    %v563 = vpop.permute.xlu0 %562
    %v564 = vsel %vm338, %v561, %v563
    %v566 = vmul.f32 %v557, %v564
    %v567 = vmul.f32 %v558, %v564
    %568 = vadd.xlane.f32.xlu0 %v566
    %v569 = vpop.xlane.xlu0 %568
    %570 = vadd.xlane.f32.xlu0 %v567
    %v571 = vpop.xlane.xlu0 %570
    %v572 = vmul.f32 %v569, 0.03125
    %v573 = vmul.f32 %v571, 0.03125
    %v574 = vsub.f32 %v557, %v572
    %v575 = vsub.f32 %v558, %v573
    %v576 = vmul.f32 %v574, %v564
    %v577 = vmul.f32 %v575, %v564
    %v578 = vmul.f32 %v576, %v576
    %v579 = vmul.f32 %v577, %v577
    %580 = vadd.xlane.f32.xlu0 %v578
    %v581 = vpop.xlane.xlu0 %580
    %582 = vadd.xlane.f32.xlu0 %v579
    %v583 = vpop.xlane.xlu0 %582
    %v584 = vmul.f32 %v581, 0.03125
    %v585 = vmul.f32 %v583, 0.03125
    %v586 = vld [vmem:[%s7] sm:$0xff]
    %v587 = vld [vmem:[%s7 + $0x8] sm:$0xff]
    %v588 = vadd.f32 %v584, 1e-05
    %v589 = vadd.f32 %v585, 1e-05
    %v590 = vrsqrt.pop %v588
    %v591 = vmul.f32 %v590, %v588
    %v592 = vmul.f32 %v591, %v590
    %v593 = vmul.f32 0.5, %v592
    %v594 = vsub.f32 1.5, %v593
    %v595 = vmul.f32 %v590, %v594
    %vm596 = vweird.f32 %v588
    %vm597 = vweird.f32 %v590
    %vm598 = vmor %vm596, %vm597
    %v599 = vsel %vm598, %v590, %v595
    %v600 = vrsqrt.pop %v589
    %v601 = vmul.f32 %v600, %v589
    %v602 = vmul.f32 %v601, %v600
    %v603 = vmul.f32 0.5, %v602
    %v604 = vsub.f32 1.5, %v603
    %v605 = vmul.f32 %v600, %v604
    %vm606 = vweird.f32 %v589
    %vm607 = vweird.f32 %v600
    %vm608 = vmor %vm606, %vm607
    %v609 = vsel %vm608, %v600, %v605
    %v610 = vmul.f32 %v574, %v599
    %v611 = vmul.f32 %v575, %v609
    %613 = vset.pattern.permute.xlu0 0
    %614 = vperm.xlu0 %613, %v586
    %v615 = vpop.permute.xlu0 %614
    %618 = vset.pattern.permute.xlu0 0
    %619 = vperm.xlu0 %618, %v587
    %v620 = vpop.permute.xlu0 %619
    %v622 = vmul.f32 %v615, %v610
    %v623 = vmul.f32 %v620, %v611
    %v624 = vld [vmem:[%s8] sm:$0xff]
    %v625 = vld [vmem:[%s8 + $0x8] sm:$0xff]
    %627 = vset.pattern.permute.xlu0 0
    %628 = vperm.xlu0 %627, %v624
    %v629 = vpop.permute.xlu0 %628
    %632 = vset.pattern.permute.xlu0 0
    %633 = vperm.xlu0 %632, %v625
    %v634 = vpop.permute.xlu0 %633
    %v636 = vadd.f32 %v622, %v629
    %v637 = vadd.f32 %v623, %v634
    %vm638 = vcmp.ge.f32.partialorder %v636, 0.0
    %vm639 = vcmp.ge.f32.partialorder %v637, 0.0
    %v640 = vstv %s559
    %v641 = vmul.f32 %v640, %v636
    %v642 = vmul.f32 %v640, %v637
    %v643 = vsel %vm638, %v636, %v641
    %v644 = vsel %vm639, %v637, %v642
    %645 = vst [vmem:[#allocation5] sm:$0xff] %v643
    %646 = vst [vmem:[#allocation5 + $0x8] sm:$0xff] %v644
    // Predicated region
    $region46: #{tpu_custom_call.1} parent=1 // pred_check
      _
    $region47: #{tpu_custom_call.1} parent=1 // pred_check_branch
      %648 = sbr.rel (0) target = $region49
    $region48: #{tpu_custom_call.1} parent=1 // pred_region
      %650 = vsyncadd [#allocation3], 0
      %s651 = sshll.u32 [#allocation5], 4
      %s652 = int_to_ptr.vmem [resolvable:$true] %s651
      %s653 = sshll.u32 %s10, 4
      %s654 = int_to_ptr.hbm [resolvable:$true] %s653
      %659 = dma.vmem_to_hbm [thread:$0]  %s652, 256, %s654, [#allocation3], 128, 128, 8
    $region49: #{tpu_custom_call.1} parent=1 // pred_fallthru
      _
    // Predicated region
    $region50: #{tpu_custom_call.1} parent=1 // pred_check
      _
    $region51: #{tpu_custom_call.1} parent=1 // pred_check_branch
      %661 = sbr.rel (0) target = $region53
    $region52: #{tpu_custom_call.1} parent=1 // pred_region
      %663 = dma.done [#allocation3], 256
    $region53: #{tpu_custom_call.1} parent=1 // pred_fallthru
      _
    %664 = vsyncpa [#allocation3], 1
    %665 = vsyncpa [#allocation4], 1

</llo_original>
